<compile_context>
chip_gen: v5e
topology: v5e:2x2
jax: 0.10.0
libtpu: 0.0.40
codegen_flags: <defaults>
</compile_context>

<pallas_src>
import jax
import jax.numpy as jnp
from jax.experimental import pallas as pl
from jax.experimental.pallas import tpu as pltpu

D_IN, D_H1, D_H2, D_OUT = 12, 128, 256, 64
BN_EPS = 1e-5


def _round_up(n, m):
    return ((n + m - 1) // m) * m


def _mlp_kernel(x_ref, w1_ref, s1_ref, w2_ref, s2_ref, w3_ref, s3_ref, o_ref):
    # Layer 1: Linear(12,128) (BN scale folded into w1) + shift + ReLU.
    # K=12 is mostly MXU padding; negligible cost, kept on the MXU.
    h = jnp.dot(x_ref[...], w1_ref[...], preferred_element_type=jnp.float32)
    h = jnp.maximum(h + s1_ref[...], 0.0)
    # (Dropout p=0.5: identity in eval mode.)

    # Layer 2: Linear(128,256) + shift + ReLU.
    h = jnp.dot(h.astype(jnp.bfloat16), w2_ref[...],
                preferred_element_type=jnp.float32)
    h = jnp.maximum(h + s2_ref[...], 0.0)
    # (Dropout p=0.6: identity in eval mode.)

    # Layer 3: Linear(256,64) + shift + ReLU.
    h = jnp.dot(h.astype(jnp.bfloat16), w3_ref[...],
                preferred_element_type=jnp.float32)
    h = jnp.maximum(h + s3_ref[...], 0.0)

    o_ref[...] = h.astype(o_ref.dtype)


def feat_l_luad_forward(x, params, *, block_b=1024):
    """x: (B, 12) float -> (B, 64) float32."""
    w1, s1, w2, s2, w3, s3 = params
    B = x.shape[0]

    # Batch tile: multiple of 8 sublanes, as large as possible (per-grid-step
    # overhead dominates at small tiles), but capped so the batch grid keeps
    # >= 4 steps at large B (v7x: both TensorCores get grid steps).
    TB = min(block_b, _round_up(B, 8))
    TB = min(TB, max(8, _round_up(-(-B // 4), 8)))
    Bp = _round_up(B, TB)

    x = x.astype(jnp.bfloat16)     # half the input DMA; MXU-native dtype
    if Bp != B:
        x = jnp.pad(x, ((0, Bp - B), (0, 0)))

    def resident(shape):
        # Constant block index -> Pallas keeps the operand VMEM-resident
        # (no re-DMA across grid steps).
        return pl.BlockSpec(shape, lambda i, _s=shape: (0,) * len(_s))

    out = pl.pallas_call(
        _mlp_kernel,
        out_shape=jax.ShapeDtypeStruct((Bp, D_OUT), jnp.float32),
        grid=(pl.cdiv(Bp, TB),),
        in_specs=[
            pl.BlockSpec((TB, D_IN), lambda i: (i, 0)),   # pipelined per tile
            resident((D_IN, D_H1)), resident((1, D_H1)),
            resident((D_H1, D_H2)), resident((1, D_H2)),
            resident((D_H2, D_OUT)), resident((1, D_OUT)),
        ],
        out_specs=pl.BlockSpec((TB, D_OUT), lambda i: (i, 0)),
        compiler_params=pltpu.CompilerParams(
            dimension_semantics=("parallel",)),
    )(x, w1, s1, w2, s2, w3, s3)

    return out if Bp == B else out[:B]


def make_params(key):
    keys = jax.random.split(key, 6)

    def layer(k_w, k_b, fan_in, fan_out):
        # torch.nn.init.xavier_uniform_ bound; stored as (in, out) for the kernel.
        bound = (6.0 / (fan_in + fan_out)) ** 0.5
        w = jax.random.uniform(k_w, (fan_in, fan_out), jnp.float32, -bound, bound)
        # nn.Linear default bias init: U(-1/sqrt(fan_in), 1/sqrt(fan_in))
        bb = 1.0 / (fan_in ** 0.5)
        b = jax.random.uniform(k_b, (fan_out,), jnp.float32, -bb, bb)
        # Eval-mode BatchNorm1d with default params / running stats.
        gamma = jnp.ones((fan_out,), jnp.float32)
        beta = jnp.zeros((fan_out,), jnp.float32)
        running_mean = jnp.zeros((fan_out,), jnp.float32)
        running_var = jnp.ones((fan_out,), jnp.float32)
        scale = gamma / jnp.sqrt(running_var + BN_EPS)
        # y = scale * (x@w + b - mean) + beta  ==  x @ (w*scale) + shift
        shift = beta + (b - running_mean) * scale
        w_folded = w * scale[None, :]
        return (w_folded.astype(jnp.bfloat16),
                shift.reshape(1, -1).astype(jnp.float32))

    w1, s1 = layer(keys[0], keys[1], D_IN, D_H1)
    w2, s2 = layer(keys[2], keys[3], D_H1, D_H2)
    w3, s3 = layer(keys[4], keys[5], D_H2, D_OUT)
    return (w1, s1, w2, s2, w3, s3)


def reference_forward(x, params):
    """Pure-JAX reference mirroring the kernel's bf16-operand / f32-accum math."""
    w1, s1, w2, s2, w3, s3 = params
    h = jnp.dot(x.astype(jnp.bfloat16), w1, preferred_element_type=jnp.float32)
    h = jnp.maximum(h + s1, 0.0)
    h = jnp.dot(h.astype(jnp.bfloat16), w2, preferred_element_type=jnp.float32)
    h = jnp.maximum(h + s2, 0.0)
    h = jnp.dot(h.astype(jnp.bfloat16), w3, preferred_element_type=jnp.float32)
    h = jnp.maximum(h + s3, 0.0)
    return h


if __name__ == "__main__":
    key = jax.random.PRNGKey(0)
    k_x, k_p = jax.random.split(key)
    B = 8
    x = jax.random.normal(k_x, (B, D_IN), jnp.float32)
    params = make_params(k_p)

    out = feat_l_luad_forward(x, params)
    out = jax.block_until_ready(out)

    ref = reference_forward(x, params)
    assert out.shape == (B, D_OUT)
    assert out.dtype == jnp.float32
    assert jnp.allclose(out, ref, atol=1e-2, rtol=1e-2)
    print("KERNEL_OK")
</pallas_src>

<mosaic_0001>
module attributes {stable_mosaic.version = 11 : i64} {
  func.func @_mlp_kernel(%arg0: i32, %arg1: memref<8x12xbf16, #tpu.memory_space<vmem>>, %arg2: memref<12x128xbf16, #tpu.memory_space<vmem>>, %arg3: memref<1x128xf32, #tpu.memory_space<vmem>>, %arg4: memref<128x256xbf16, #tpu.memory_space<vmem>>, %arg5: memref<1x256xf32, #tpu.memory_space<vmem>>, %arg6: memref<256x64xbf16, #tpu.memory_space<vmem>>, %arg7: memref<1x64xf32, #tpu.memory_space<vmem>>, %arg8: memref<8x64xf32, #tpu.memory_space<vmem>>) attributes {dimension_semantics = [#tpu.dimension_semantics<parallel>], iteration_bounds = array<i64: 1>, scalar_prefetch = 0 : i64, scratch_operands = 0 : i64, tpu.core_type = #tpu.core_type<tc>, window_params = [{transform_indices = @transform_0, window_bounds = array<i64: 8, 12>}, {pipeline_mode = #tpu.pipeline_mode<synchronous>, transform_indices = @transform_1, window_bounds = array<i64: 12, 128>}, {pipeline_mode = #tpu.pipeline_mode<synchronous>, transform_indices = @transform_2, window_bounds = array<i64: 1, 128>}, {pipeline_mode = #tpu.pipeline_mode<synchronous>, transform_indices = @transform_3, window_bounds = array<i64: 128, 256>}, {pipeline_mode = #tpu.pipeline_mode<synchronous>, transform_indices = @transform_4, window_bounds = array<i64: 1, 256>}, {pipeline_mode = #tpu.pipeline_mode<synchronous>, transform_indices = @transform_5, window_bounds = array<i64: 256, 64>}, {pipeline_mode = #tpu.pipeline_mode<synchronous>, transform_indices = @transform_6, window_bounds = array<i64: 1, 64>}, {transform_indices = @transform_7, window_bounds = array<i64: 8, 64>}]} {
    %c0 = arith.constant 0 : index
    %c0_0 = arith.constant 0 : index
    %0 = vector.load %arg1[%c0, %c0_0] : memref<8x12xbf16, #tpu.memory_space<vmem>>, vector<8x12xbf16>
    %c0_1 = arith.constant 0 : index
    %c0_2 = arith.constant 0 : index
    %1 = vector.load %arg2[%c0_1, %c0_2] : memref<12x128xbf16, #tpu.memory_space<vmem>>, vector<12x128xbf16>
    %cst = arith.constant dense<0.000000e+00> : vector<8x128xf32>
    %2 = tpu.matmul %0, %1, %cst {dimension_numbers = #tpu.dot_dimension_numbers<[1], [0], [0], [1], [0, 0, 1, 1], [], []>} : vector<8x12xbf16>, vector<12x128xbf16>, vector<8x128xf32> -> vector<8x128xf32>
    %c0_3 = arith.constant 0 : index
    %c0_4 = arith.constant 0 : index
    %3 = vector.load %arg3[%c0_3, %c0_4] : memref<1x128xf32, #tpu.memory_space<vmem>>, vector<1x128xf32>
    %4 = vector.broadcast %3 : vector<1x128xf32> to vector<8x128xf32>
    %5 = arith.addf %2, %4 : vector<8x128xf32>
    %cst_5 = arith.constant 0.000000e+00 : f32
    %6 = vector.broadcast %cst_5 : f32 to vector<8x128xf32>
    %7 = arith.maximumf %5, %6 : vector<8x128xf32>
    %8 = arith.truncf %7 : vector<8x128xf32> to vector<8x128xbf16>
    %c0_6 = arith.constant 0 : index
    %c0_7 = arith.constant 0 : index
    %9 = vector.load %arg4[%c0_6, %c0_7] : memref<128x256xbf16, #tpu.memory_space<vmem>>, vector<128x256xbf16>
    %cst_8 = arith.constant dense<0.000000e+00> : vector<8x256xf32>
    %10 = tpu.matmul %8, %9, %cst_8 {dimension_numbers = #tpu.dot_dimension_numbers<[1], [0], [0], [1], [0, 0, 1, 1], [], []>} : vector<8x128xbf16>, vector<128x256xbf16>, vector<8x256xf32> -> vector<8x256xf32>
    %c0_9 = arith.constant 0 : index
    %c0_10 = arith.constant 0 : index
    %11 = vector.load %arg5[%c0_9, %c0_10] : memref<1x256xf32, #tpu.memory_space<vmem>>, vector<1x256xf32>
    %12 = vector.broadcast %11 : vector<1x256xf32> to vector<8x256xf32>
    %13 = arith.addf %10, %12 : vector<8x256xf32>
    %cst_11 = arith.constant 0.000000e+00 : f32
    %14 = vector.broadcast %cst_11 : f32 to vector<8x256xf32>
    %15 = arith.maximumf %13, %14 : vector<8x256xf32>
    %16 = arith.truncf %15 : vector<8x256xf32> to vector<8x256xbf16>
    %c0_12 = arith.constant 0 : index
    %c0_13 = arith.constant 0 : index
    %17 = vector.load %arg6[%c0_12, %c0_13] : memref<256x64xbf16, #tpu.memory_space<vmem>>, vector<256x64xbf16>
    %cst_14 = arith.constant dense<0.000000e+00> : vector<8x64xf32>
    %18 = tpu.matmul %16, %17, %cst_14 {dimension_numbers = #tpu.dot_dimension_numbers<[1], [0], [0], [1], [0, 0, 1, 1], [], []>} : vector<8x256xbf16>, vector<256x64xbf16>, vector<8x64xf32> -> vector<8x64xf32>
    %c0_15 = arith.constant 0 : index
    %c0_16 = arith.constant 0 : index
    %19 = vector.load %arg7[%c0_15, %c0_16] : memref<1x64xf32, #tpu.memory_space<vmem>>, vector<1x64xf32>
    %20 = vector.broadcast %19 : vector<1x64xf32> to vector<8x64xf32>
    %21 = arith.addf %18, %20 : vector<8x64xf32>
    %cst_17 = arith.constant 0.000000e+00 : f32
    %22 = vector.broadcast %cst_17 : f32 to vector<8x64xf32>
    %23 = arith.maximumf %21, %22 : vector<8x64xf32>
    %c0_18 = arith.constant 0 : index
    %c0_19 = arith.constant 0 : index
    %24 = vector.load %arg8[%c0_18, %c0_19] : memref<8x64xf32, #tpu.memory_space<vmem>>, vector<8x64xf32>
    tpu.vector_store %arg8[%c0_18, %c0_19], %23 {strides = array<i32>} : memref<8x64xf32, #tpu.memory_space<vmem>>, vector<8x64xf32>,
    return
  }
  func.func @transform_0(%arg0: i32) -> (i32, i32) {
    %c0_i32 = arith.constant 0 : i32
    %c0_i32_0 = arith.constant 0 : i32
    return %arg0, %c0_i32 : i32, i32
  }
  func.func @transform_1(%arg0: i32) -> (i32, i32) {
    %c0_i32 = arith.constant 0 : i32
    %c0_i32_0 = arith.constant 0 : i32
    %c0_i32_1 = arith.constant 0 : i32
    return %c0_i32, %c0_i32_0 : i32, i32
  }
  func.func @transform_2(%arg0: i32) -> (i32, i32) {
    %c0_i32 = arith.constant 0 : i32
    %c0_i32_0 = arith.constant 0 : i32
    %c0_i32_1 = arith.constant 0 : i32
    return %c0_i32, %c0_i32_0 : i32, i32
  }
  func.func @transform_3(%arg0: i32) -> (i32, i32) {
    %c0_i32 = arith.constant 0 : i32
    %c0_i32_0 = arith.constant 0 : i32
    %c0_i32_1 = arith.constant 0 : i32
    return %c0_i32, %c0_i32_0 : i32, i32
  }
  func.func @transform_4(%arg0: i32) -> (i32, i32) {
    %c0_i32 = arith.constant 0 : i32
    %c0_i32_0 = arith.constant 0 : i32
    %c0_i32_1 = arith.constant 0 : i32
    return %c0_i32, %c0_i32_0 : i32, i32
  }
  func.func @transform_5(%arg0: i32) -> (i32, i32) {
    %c0_i32 = arith.constant 0 : i32
    %c0_i32_0 = arith.constant 0 : i32
    %c0_i32_1 = arith.constant 0 : i32
    return %c0_i32, %c0_i32_0 : i32, i32
  }
  func.func @transform_6(%arg0: i32) -> (i32, i32) {
    %c0_i32 = arith.constant 0 : i32
    %c0_i32_0 = arith.constant 0 : i32
    %c0_i32_1 = arith.constant 0 : i32
    return %c0_i32, %c0_i32_0 : i32, i32
  }
  func.func @transform_7(%arg0: i32) -> (i32, i32) {
    %c0_i32 = arith.constant 0 : i32
    %c0_i32_0 = arith.constant 0 : i32
    return %arg0, %c0_i32 : i32, i32
  }
}

</mosaic_0001>

<llo_original>
// kernel: tpu_custom_call.1
$region0: #{tpu_custom_call.1}
  #allocation0 [shape = 'u32[]', space=smem, size = 0x4, offset = 0x4, fixed_abs, tag = 'smem constant byte address 0x4 - core index']
  #allocation1 [shape = 'u32[72,128]{1,0:T(1,128)}', space=vmem, size = 0x9000, scoped, tag = 'internal scratch']
  %s0 = inlined_call_operand.vmem [shape: bf16[8,12], index: 0, kind: input, shape index: {}]
  %s1 = inlined_call_operand.vmem [shape: bf16[12,128], index: 1, kind: input, shape index: {}]
  %s2 = inlined_call_operand.vmem [shape: f32[1,128], index: 2, kind: input, shape index: {}]
  %s3 = inlined_call_operand.vmem [shape: bf16[128,256], index: 3, kind: input, shape index: {}]
  %s4 = inlined_call_operand.vmem [shape: f32[1,256], index: 4, kind: input, shape index: {}]
  %s5 = inlined_call_operand.vmem [shape: bf16[256,64], index: 5, kind: input, shape index: {}]
  %s6 = inlined_call_operand.vmem [shape: f32[1,64], index: 6, kind: input, shape index: {}]
  %s7 = inlined_call_operand.hbm [shape: f32[8,64], index: 7, kind: output, shape index: {}]
  %s8 = sld [smem:[#allocation0]]
  $region38: #{tpu_custom_call.1} parent=0
    _
  %s10 = ssub.s32 1, %s8
  %s11 = scalar_select 0, %s10, %s8
  $region1: #{tpu_custom_call.1} parent=0
    #allocation2 [shape = 'u8[4096]{0}', space=vmem, size = 0x1000, scoped, tag = 'output window, operand 0, single buffered']
    #allocation3 [shape = 's32[1]{0}', space=sflag, size = 0x4, scoped, tag = 'scoped memory for tpu_custom_call.1']
    %12 = vsyncpa [#allocation3], 0
    // Predicated region
    $region2: #{tpu_custom_call.1} parent=1 // pred_check
      _
    $region3: #{tpu_custom_call.1} parent=1 // pred_check_branch
      %14 = sbr.rel (0) target = $region5
    $region4: #{tpu_custom_call.1} parent=1 // pred_region
      _
    $region5: #{tpu_custom_call.1} parent=1 // pred_fallthru
      _
    // Predicated region
    $region6: #{tpu_custom_call.1} parent=1 // pred_check
      _
    $region7: #{tpu_custom_call.1} parent=1 // pred_check_branch
      %16 = sbr.rel (0) target = $region9
    $region8: #{tpu_custom_call.1} parent=1 // pred_region
      _
    $region9: #{tpu_custom_call.1} parent=1 // pred_fallthru
      _
    // Predicated region
    $region10: #{tpu_custom_call.1} parent=1 // pred_check
      _
    $region11: #{tpu_custom_call.1} parent=1 // pred_check_branch
      %18 = sbr.rel (0) target = $region13
    $region12: #{tpu_custom_call.1} parent=1 // pred_region
      _
    $region13: #{tpu_custom_call.1} parent=1 // pred_fallthru
      _
    // Predicated region
    $region14: #{tpu_custom_call.1} parent=1 // pred_check
      _
    $region15: #{tpu_custom_call.1} parent=1 // pred_check_branch
      %20 = sbr.rel (0) target = $region17
    $region16: #{tpu_custom_call.1} parent=1 // pred_region
      _
    $region17: #{tpu_custom_call.1} parent=1 // pred_fallthru
      _
    // Predicated region
    $region18: #{tpu_custom_call.1} parent=1 // pred_check
      _
    $region19: #{tpu_custom_call.1} parent=1 // pred_check_branch
      %22 = sbr.rel (0) target = $region21
    $region20: #{tpu_custom_call.1} parent=1 // pred_region
      _
    $region21: #{tpu_custom_call.1} parent=1 // pred_fallthru
      _
    // Predicated region
    $region22: #{tpu_custom_call.1} parent=1 // pred_check
      _
    $region23: #{tpu_custom_call.1} parent=1 // pred_check_branch
      %24 = sbr.rel (0) target = $region25
    $region24: #{tpu_custom_call.1} parent=1 // pred_region
      _
    $region25: #{tpu_custom_call.1} parent=1 // pred_fallthru
      _
    // Predicated region
    $region26: #{tpu_custom_call.1} parent=1 // pred_check
      _
    $region27: #{tpu_custom_call.1} parent=1 // pred_check_branch
      %26 = sbr.rel (0) target = $region29
    $region28: #{tpu_custom_call.1} parent=1 // pred_region
      _
    $region29: #{tpu_custom_call.1} parent=1 // pred_fallthru
      _
    %v28 = vld [vmem:[%s0] sm:$0xf]
    %v29 = vld [vmem:[%s1] sm:$0xf]
    %v30 = vld [vmem:[%s1 + $0x4] sm:$0x3]
    %v31 = vld [vmem:[%s2] sm:$0x1]
    %v33 = vperm.slane %v31, 0
    %v37 = vunpack.c.l.b16 %v29
    %v38 = vunpack.c.l.b16 %v30
    %v39 = vpack.c.b16 %v38, %v37
    %vm40 = vcmask 97280
    %v42 = vsel %vm40, %v28, 0
    %vm44 = vcmask 1045504
    %v46 = vsel %vm44, %v39, 0
    %48 = vmatpush.bf16.msra.mxu0 0
    %49 = vmatpush.bf16.msra.mxu0 0
    %50 = vmatpush.bf16.msra.mxu0 0
    %51 = vmatpush.bf16.msra.mxu0 0
    %52 = vmatpush.bf16.msra.mxu0 0
    %53 = vmatpush.bf16.msra.mxu0 0
    %54 = vmatpush.bf16.msra.mxu0 0
    %55 = vmatpush.bf16.msra.mxu0 %v46
    %56 = vmatmul.bf16.gmra.mxu0 %v42
    %v57 = vpop.f32.mrf.mxu0
    %v58 = vadd.f32 %v33, %v57
    %v59 = vpop.f32.mrf.mxu0
    %60 = vdwg.mxu0
    %v61 = vmax.f32 %v58, 0.0
    %v62 = vpack.c.bf16 %v61, %v61
    %v63 = vld [vmem:[%s3] sm:$0xff]
    %v64 = vld [vmem:[%s3 + $0x8] sm:$0xff]
    %v65 = vld [vmem:[%s3 + $0x10] sm:$0xff]
    %v66 = vld [vmem:[%s3 + $0x18] sm:$0xff]
    %v67 = vld [vmem:[%s3 + $0x20] sm:$0xff]
    %v68 = vld [vmem:[%s3 + $0x28] sm:$0xff]
    %v69 = vld [vmem:[%s3 + $0x30] sm:$0xff]
    %v70 = vld [vmem:[%s3 + $0x38] sm:$0xff]
    %v71 = vld [vmem:[%s3 + $0x40] sm:$0xff]
    %v72 = vld [vmem:[%s3 + $0x48] sm:$0xff]
    %v73 = vld [vmem:[%s3 + $0x50] sm:$0xff]
    %v74 = vld [vmem:[%s3 + $0x58] sm:$0xff]
    %v75 = vld [vmem:[%s3 + $0x60] sm:$0xff]
    %v76 = vld [vmem:[%s3 + $0x68] sm:$0xff]
    %v77 = vld [vmem:[%s3 + $0x70] sm:$0xff]
    %v78 = vld [vmem:[%s3 + $0x78] sm:$0xff]
    %v79 = vld [vmem:[%s4] sm:$0x3]
    %v81 = vperm.slane %v79, 0
    %v82 = vperm.slane %v79, 1
    %v101 = vunpack.c.l.b16 %v63
    %v102 = vunpack.c.h.b16 %v63
    %v103 = vunpack.c.l.b16 %v64
    %v104 = vunpack.c.h.b16 %v64
    %v105 = vunpack.c.l.b16 %v65
    %v106 = vunpack.c.h.b16 %v65
    %v107 = vunpack.c.l.b16 %v66
    %v108 = vunpack.c.h.b16 %v66
    %v109 = vunpack.c.l.b16 %v67
    %v110 = vunpack.c.h.b16 %v67
    %v111 = vunpack.c.l.b16 %v68
    %v112 = vunpack.c.h.b16 %v68
    %v113 = vunpack.c.l.b16 %v69
    %v114 = vunpack.c.h.b16 %v69
    %v115 = vunpack.c.l.b16 %v70
    %v116 = vunpack.c.h.b16 %v70
    %v117 = vunpack.c.l.b16 %v71
    %v118 = vunpack.c.h.b16 %v71
    %v119 = vunpack.c.l.b16 %v72
    %v120 = vunpack.c.h.b16 %v72
    %v121 = vunpack.c.l.b16 %v73
    %v122 = vunpack.c.h.b16 %v73
    %v123 = vunpack.c.l.b16 %v74
    %v124 = vunpack.c.h.b16 %v74
    %v125 = vunpack.c.l.b16 %v75
    %v126 = vunpack.c.h.b16 %v75
    %v127 = vunpack.c.l.b16 %v76
    %v128 = vunpack.c.h.b16 %v76
    %v129 = vunpack.c.l.b16 %v77
    %v130 = vunpack.c.h.b16 %v77
    %v131 = vunpack.c.l.b16 %v78
    %v132 = vunpack.c.h.b16 %v78
    %v133 = vpack.c.b16 %v103, %v101
    %v134 = vpack.c.b16 %v104, %v102
    %v135 = vpack.c.b16 %v107, %v105
    %v136 = vpack.c.b16 %v108, %v106
    %v137 = vpack.c.b16 %v111, %v109
    %v138 = vpack.c.b16 %v112, %v110
    %v139 = vpack.c.b16 %v115, %v113
    %v140 = vpack.c.b16 %v116, %v114
    %v141 = vpack.c.b16 %v119, %v117
    %v142 = vpack.c.b16 %v120, %v118
    %v143 = vpack.c.b16 %v123, %v121
    %v144 = vpack.c.b16 %v124, %v122
    %v145 = vpack.c.b16 %v127, %v125
    %v146 = vpack.c.b16 %v128, %v126
    %v147 = vpack.c.b16 %v131, %v129
    %v148 = vpack.c.b16 %v132, %v130
    %165 = vmatpush.bf16.msra.mxu0 %v147
    %166 = vmatpush.bf16.msra.mxu0 %v145
    %167 = vmatpush.bf16.msra.mxu0 %v143
    %168 = vmatpush.bf16.msra.mxu0 %v141
    %169 = vmatpush.bf16.msra.mxu0 %v139
    %170 = vmatpush.bf16.msra.mxu0 %v137
    %171 = vmatpush.bf16.msra.mxu0 %v135
    %172 = vmatpush.bf16.msra.mxu0 %v133
    %173 = vmatmul.bf16.gmra.mxu0 %v62
    %v174 = vpop.f32.mrf.mxu0
    %v175 = vadd.f32 %v81, %v174
    %v176 = vpop.f32.mrf.mxu0
    %177 = vdwg.mxu0
    %178 = vmatpush.bf16.msra.mxu0 %v148
    %179 = vmatpush.bf16.msra.mxu0 %v146
    %180 = vmatpush.bf16.msra.mxu0 %v144
    %181 = vmatpush.bf16.msra.mxu0 %v142
    %182 = vmatpush.bf16.msra.mxu0 %v140
    %183 = vmatpush.bf16.msra.mxu0 %v138
    %184 = vmatpush.bf16.msra.mxu0 %v136
    %185 = vmatpush.bf16.msra.mxu0 %v134
    %186 = vmatmul.bf16.gmra.mxu0 %v62
    %v187 = vpop.f32.mrf.mxu0
    %v188 = vadd.f32 %v82, %v187
    %v189 = vpop.f32.mrf.mxu0
    %190 = vdwg.mxu0
    %v191 = vmax.f32 %v175, 0.0
    %v192 = vmax.f32 %v188, 0.0
    %v193 = vpack.c.bf16 %v191, %v191
    %v194 = vpack.c.bf16 %v192, %v192
    %v195 = vld [vmem:[%s5] sm:$0xf]
    %v196 = vld [vmem:[%s5 + $0x4] sm:$0xf]
    %v197 = vld [vmem:[%s5 + $0x8] sm:$0xf]
    %v198 = vld [vmem:[%s5 + $0xc] sm:$0xf]
    %v199 = vld [vmem:[%s5 + $0x10] sm:$0xf]
    %v200 = vld [vmem:[%s5 + $0x14] sm:$0xf]
    %v201 = vld [vmem:[%s5 + $0x18] sm:$0xf]
    %v202 = vld [vmem:[%s5 + $0x1c] sm:$0xf]
    %v203 = vld [vmem:[%s5 + $0x20] sm:$0xf]
    %v204 = vld [vmem:[%s5 + $0x24] sm:$0xf]
    %v205 = vld [vmem:[%s5 + $0x28] sm:$0xf]
    %v206 = vld [vmem:[%s5 + $0x2c] sm:$0xf]
    %v207 = vld [vmem:[%s5 + $0x30] sm:$0xf]
    %v208 = vld [vmem:[%s5 + $0x34] sm:$0xf]
    %v209 = vld [vmem:[%s5 + $0x38] sm:$0xf]
    %v210 = vld [vmem:[%s5 + $0x3c] sm:$0xf]
    %v211 = vld [vmem:[%s5 + $0x40] sm:$0xf]
    %v212 = vld [vmem:[%s5 + $0x44] sm:$0xf]
    %v213 = vld [vmem:[%s5 + $0x48] sm:$0xf]
    %v214 = vld [vmem:[%s5 + $0x4c] sm:$0xf]
    %v215 = vld [vmem:[%s5 + $0x50] sm:$0xf]
    %v216 = vld [vmem:[%s5 + $0x54] sm:$0xf]
    %v217 = vld [vmem:[%s5 + $0x58] sm:$0xf]
    %v218 = vld [vmem:[%s5 + $0x5c] sm:$0xf]
    %v219 = vld [vmem:[%s5 + $0x60] sm:$0xf]
    %v220 = vld [vmem:[%s5 + $0x64] sm:$0xf]
    %v221 = vld [vmem:[%s5 + $0x68] sm:$0xf]
    %v222 = vld [vmem:[%s5 + $0x6c] sm:$0xf]
    %v223 = vld [vmem:[%s5 + $0x70] sm:$0xf]
    %v224 = vld [vmem:[%s5 + $0x74] sm:$0xf]
    %v225 = vld [vmem:[%s5 + $0x78] sm:$0xf]
    %v226 = vld [vmem:[%s5 + $0x7c] sm:$0xf]
    %v227 = vld [vmem:[%s6] sm:$0x1]
    %v229 = vperm.slane %v227, 0
    %v263 = vunpack.c.l.b16 %v195
    %v264 = vunpack.c.l.b16 %v196
    %v265 = vunpack.c.l.b16 %v197
    %v266 = vunpack.c.l.b16 %v198
    %v267 = vunpack.c.l.b16 %v199
    %v268 = vunpack.c.l.b16 %v200
    %v269 = vunpack.c.l.b16 %v201
    %v270 = vunpack.c.l.b16 %v202
    %v271 = vunpack.c.l.b16 %v203
    %v272 = vunpack.c.l.b16 %v204
    %v273 = vunpack.c.l.b16 %v205
    %v274 = vunpack.c.l.b16 %v206
    %v275 = vunpack.c.l.b16 %v207
    %v276 = vunpack.c.l.b16 %v208
    %v277 = vunpack.c.l.b16 %v209
    %v278 = vunpack.c.l.b16 %v210
    %v279 = vunpack.c.l.b16 %v211
    %v280 = vunpack.c.l.b16 %v212
    %v281 = vunpack.c.l.b16 %v213
    %v282 = vunpack.c.l.b16 %v214
    %v283 = vunpack.c.l.b16 %v215
    %v284 = vunpack.c.l.b16 %v216
    %v285 = vunpack.c.l.b16 %v217
    %v286 = vunpack.c.l.b16 %v218
    %v287 = vunpack.c.l.b16 %v219
    %v288 = vunpack.c.l.b16 %v220
    %v289 = vunpack.c.l.b16 %v221
    %v290 = vunpack.c.l.b16 %v222
    %v291 = vunpack.c.l.b16 %v223
    %v292 = vunpack.c.l.b16 %v224
    %v293 = vunpack.c.l.b16 %v225
    %v294 = vunpack.c.l.b16 %v226
    %v295 = vpack.c.b16 %v264, %v263
    %v296 = vpack.c.b16 %v266, %v265
    %v297 = vpack.c.b16 %v268, %v267
    %v298 = vpack.c.b16 %v270, %v269
    %v299 = vpack.c.b16 %v272, %v271
    %v300 = vpack.c.b16 %v274, %v273
    %v301 = vpack.c.b16 %v276, %v275
    %v302 = vpack.c.b16 %v278, %v277
    %v303 = vpack.c.b16 %v280, %v279
    %v304 = vpack.c.b16 %v282, %v281
    %v305 = vpack.c.b16 %v284, %v283
    %v306 = vpack.c.b16 %v286, %v285
    %v307 = vpack.c.b16 %v288, %v287
    %v308 = vpack.c.b16 %v290, %v289
    %v309 = vpack.c.b16 %v292, %v291
    %v310 = vpack.c.b16 %v294, %v293
    %327 = vmatpush.bf16.msra.mxu0 %v302
    %328 = vmatpush.bf16.msra.mxu0 %v301
    %329 = vmatpush.bf16.msra.mxu0 %v300
    %330 = vmatpush.bf16.msra.mxu0 %v299
    %331 = vmatpush.bf16.msra.mxu0 %v298
    %332 = vmatpush.bf16.msra.mxu0 %v297
    %333 = vmatpush.bf16.msra.mxu0 %v296
    %334 = vmatpush.bf16.msra.mxu0 %v295
    %335 = vmatmul.bf16.gmra.mxu0 %v193
    %v336 = vpop.f32.mrf.mxu0
    %v337 = vadd.f32 %v229, %v336
    %v338 = vpop.f32.mrf.mxu0
    %339 = vdwg.mxu0
    %340 = vmatpush.bf16.msra.mxu0 %v310
    %341 = vmatpush.bf16.msra.mxu0 %v309
    %342 = vmatpush.bf16.msra.mxu0 %v308
    %343 = vmatpush.bf16.msra.mxu0 %v307
    %344 = vmatpush.bf16.msra.mxu0 %v306
    %345 = vmatpush.bf16.msra.mxu0 %v305
    %346 = vmatpush.bf16.msra.mxu0 %v304
    %347 = vmatpush.bf16.msra.mxu0 %v303
    %348 = vmatmul.bf16.gmra.mxu0 %v194
    %v349 = vpop.f32.mrf.mxu0
    %v350 = vadd.f32 %v337, %v349
    %v351 = vpop.f32.mrf.mxu0
    %352 = vdwg.mxu0
    %v353 = vmax.f32 %v350, 0.0
    %vm354 = vcmask 523264
    %355 = vst.msk [vmem:[#allocation2] sm:$0xff] %vm354, %v353
    // Predicated region
    $region30: #{tpu_custom_call.1} parent=1 // pred_check
      _
    $region31: #{tpu_custom_call.1} parent=1 // pred_check_branch
      %357 = sbr.rel (0) target = $region33
    $region32: #{tpu_custom_call.1} parent=1 // pred_region
      %359 = vsyncadd [#allocation3], 0
      %s361 = sshll.u32 [#allocation2], 4
      %s362 = int_to_ptr.vmem [resolvable:$true] %s361
      %s363 = sshll.u32 %s7, 4
      %s364 = int_to_ptr.hbm [resolvable:$true] %s363
      %366 = dma.vmem_to_hbm [thread:$0]  %s362, 128, %s364, [#allocation3]
    $region33: #{tpu_custom_call.1} parent=1 // pred_fallthru
      _
    // Predicated region
    $region34: #{tpu_custom_call.1} parent=1 // pred_check
      _
    $region35: #{tpu_custom_call.1} parent=1 // pred_check_branch
      %368 = sbr.rel (0) target = $region37
    $region36: #{tpu_custom_call.1} parent=1 // pred_region
      %370 = dma.done [#allocation3], 128
    $region37: #{tpu_custom_call.1} parent=1 // pred_fallthru
      _
    %371 = vsyncpa [#allocation3], 1

</llo_original>
